<compile_context>
chip_gen: v7x
topology: tpu7x:2x2x1
jax: 0.10.0
libtpu: 0.0.40
codegen_flags: <defaults>
</compile_context>

<pallas_src>
import functools

import jax
import jax.numpy as jnp
from jax.experimental import pallas as pl
from jax.experimental.pallas import tpu as pltpu


def _round_up(a, m):
    return -(-a // m) * m


# ----------------------------------------------------------------------------
# Pass 1: per-channel sum / sum-of-squares of h = x @ W1^T + b1.
# grid = (P, R): P "parallel" partitions (per-core partial sums on v7x),
# R "arbitrary" row tiles per partition (accumulator revisited across R).
# Partial sums are written into sublane 0 of an (8, inner) block per partition;
# rows 1..7 stay zero so the wrapper can simply sum over axis 0.
# ----------------------------------------------------------------------------
def _stats_kernel(x_ref, w1_ref, b1_ref, sum_ref, ssq_ref, *, n_valid, needs_mask):
    p = pl.program_id(0)
    i = pl.program_id(1)

    @pl.when(i == 0)
    def _():
        sum_ref[...] = jnp.zeros_like(sum_ref)
        ssq_ref[...] = jnp.zeros_like(ssq_ref)

    h = jnp.dot(x_ref[...], w1_ref[...], preferred_element_type=jnp.float32)
    h = h + b1_ref[...]                               # conv bias (f32)

    if needs_mask:                                    # static branch: zero padded rows
        tile = x_ref.shape[0]
        row0 = (p * pl.num_programs(1) + i) * tile
        rows = row0 + jax.lax.broadcasted_iota(jnp.int32, (tile, 1), 0)
        h = jnp.where(rows < n_valid, h, 0.0)

    sum_ref[0:1, :] += jnp.sum(h, axis=0, keepdims=True)
    ssq_ref[0:1, :] += jnp.sum(h * h, axis=0, keepdims=True)


# ----------------------------------------------------------------------------
# Pass 2: recompute h = x @ W1^T + b1, apply folded BN (scale/shift) + ReLU,
# then the output matmul. Fully "parallel" over row tiles.
# ----------------------------------------------------------------------------
def _fwd_kernel(x_ref, w1_ref, b1_ref, scale_ref, shift_ref, w2_ref, b2_ref, y_ref):
    h = jnp.dot(x_ref[...], w1_ref[...], preferred_element_type=jnp.float32)
    h = h + b1_ref[...]
    h = h * scale_ref[...] + shift_ref[...]           # folded BatchNorm (f32)
    h = jnp.maximum(h, 0.0)                           # ReLU
    y = jnp.dot(h.astype(w2_ref.dtype), w2_ref[...],
                preferred_element_type=jnp.float32)
    y_ref[...] = (y + b2_ref[...]).astype(y_ref.dtype)


# ----------------------------------------------------------------------------
# Tile selection: as large as possible while keeping the per-step pipeline
# footprint comfortably inside scoped VMEM (re-derived for v7x's 64 MiB).
# ----------------------------------------------------------------------------
def _choose_tile(n_rows, c_in, inner, out_dim, requested,
                 vmem_budget=40 * 1024 * 1024):
    requested = max(8, (requested // 8) * 8)
    # resident weights (double-buffered by the pipeline) + small vectors
    weight_bytes = 4 * (c_in * inner + inner * out_dim) + 16 * inner + 8 * out_dim
    budget = max(vmem_budget - weight_bytes, 1 << 20)
    # per row: double-buffered bf16 x, double-buffered f32 y, and f32/bf16
    # intermediates of width `inner` inside the kernel body.
    per_row = 4 * c_in + 8 * out_dim + 10 * inner
    cap = max(8, (budget // per_row) // 8 * 8)
    tile = min(requested, cap)
    if n_rows <= tile:
        tile = _round_up(n_rows, 8)
    return tile


# ----------------------------------------------------------------------------
# Wrapper
# ----------------------------------------------------------------------------
def project_mlp_forward(x, params, *, tn=512, eps=1e-5, mxu_dtype=jnp.bfloat16):
    """ProjectMLP forward. x: [B, L, C_in] or [N, C_in]."""
    assert x.ndim in (2, 3), x.ndim
    add_dim = x.ndim == 2
    if add_dim:
        x = x[:, None, :]
    B, L, C_in = x.shape
    N = B * L

    w1, b1, gamma, beta, w2, b2 = (params[k] for k in
                                   ("w1", "b1", "gamma", "beta", "w2", "b2"))
    inner = w1.shape[0]
    out_dim = w2.shape[0]

    tile = _choose_tile(N, C_in, inner, out_dim, tn)
    num_tiles = -(-N // tile)
    n_pad = num_tiles * tile
    P = 2 if (num_tiles >= 2 and num_tiles % 2 == 0) else 1   # v7x megacore split
    R = num_tiles // P

    xf = x.reshape(N, C_in).astype(jnp.float32)
    if n_pad != N:
        xf = jnp.pad(xf, ((0, n_pad - N), (0, 0)))
    xf = xf.astype(mxu_dtype)                                 # bf16 MXU operand
    w1_t = jnp.transpose(w1).astype(mxu_dtype)                # [C_in, inner]
    w2_t = jnp.transpose(w2).astype(mxu_dtype)                # [inner, out]
    b1_r = b1.reshape(1, inner).astype(jnp.float32)
    b2_r = b2.reshape(1, out_dim).astype(jnp.float32)

    vmem_limit = 48 * 1024 * 1024                             # < 64 MiB (v7x)
    cparams1 = pltpu.CompilerParams(
        dimension_semantics=("parallel", "arbitrary"),
        vmem_limit_bytes=vmem_limit)
    cparams2 = pltpu.CompilerParams(
        dimension_semantics=("parallel",),
        vmem_limit_bytes=vmem_limit)

    # ---- Pass 1: BatchNorm batch statistics (sum / sum-of-squares) ----
    stats_kernel = functools.partial(
        _stats_kernel, n_valid=N, needs_mask=(n_pad != N))
    sums, ssqs = pl.pallas_call(
        stats_kernel,
        out_shape=(jax.ShapeDtypeStruct((P * 8, inner), jnp.float32),
                   jax.ShapeDtypeStruct((P * 8, inner), jnp.float32)),
        grid=(P, R),
        in_specs=[pl.BlockSpec((tile, C_in), lambda p, i: (p * R + i, 0)),
                  pl.BlockSpec((C_in, inner), lambda p, i: (0, 0)),
                  pl.BlockSpec((1, inner), lambda p, i: (0, 0))],
        out_specs=(pl.BlockSpec((8, inner), lambda p, i: (p, 0)),
                   pl.BlockSpec((8, inner), lambda p, i: (p, 0))),
        compiler_params=cparams1,
    )(xf, w1_t, b1_r)

    # ---- Fold BN (training-mode batch stats) into scale/shift once ----
    s = jnp.sum(sums, axis=0)
    ss = jnp.sum(ssqs, axis=0)
    mean = s / N
    var = jnp.maximum(ss / N - mean * mean, 0.0)              # biased variance
    inv_std = jax.lax.rsqrt(var + eps)
    g = gamma.astype(jnp.float32)
    scale = (g * inv_std).reshape(1, inner)
    shift = (beta.astype(jnp.float32) - mean * g * inv_std).reshape(1, inner)

    # ---- Pass 2: recompute hidden, fused BN + ReLU + output matmul ----
    # TODO(synk): if production out_dim < 128 and the store path is the
    # bottleneck, pad W2/b2 to a lane-dense 128-wide output and slice it here.
    y = pl.pallas_call(
        _fwd_kernel,
        out_shape=jax.ShapeDtypeStruct((n_pad, out_dim), jnp.float32),
        grid=(num_tiles,),
        in_specs=[pl.BlockSpec((tile, C_in), lambda i: (i, 0)),
                  pl.BlockSpec((C_in, inner), lambda i: (0, 0)),
                  pl.BlockSpec((1, inner), lambda i: (0, 0)),
                  pl.BlockSpec((1, inner), lambda i: (0, 0)),
                  pl.BlockSpec((1, inner), lambda i: (0, 0)),
                  pl.BlockSpec((inner, out_dim), lambda i: (0, 0)),
                  pl.BlockSpec((1, out_dim), lambda i: (0, 0))],
        out_specs=pl.BlockSpec((tile, out_dim), lambda i: (i, 0)),
        compiler_params=cparams2,
    )(xf, w1_t, b1_r, scale, shift, w2_t, b2_r)

    y = y[:N].reshape(B, L, out_dim)
    if add_dim:
        y = y[:, 0, :]
    return y


# ----------------------------------------------------------------------------
# Deterministic parameter construction (shapes follow nn.Conv1d / BatchNorm1d)
# ----------------------------------------------------------------------------
def make_params(key, in_dim, inner_dim, out_dim):
    k1, k2, k3, k4 = jax.random.split(key, 4)
    s1 = 1.0 / jnp.sqrt(in_dim)
    s2 = 1.0 / jnp.sqrt(inner_dim)
    return {
        # Conv1d(in_dim, inner_dim, k=1): weight [inner, in_dim] (kernel dim squeezed)
        "w1": jax.random.uniform(k1, (inner_dim, in_dim), jnp.float32, -s1, s1),
        "b1": jax.random.uniform(k2, (inner_dim,), jnp.float32, -s1, s1),
        # BatchNorm1d(inner_dim)
        "gamma": jnp.ones((inner_dim,), jnp.float32),
        "beta": jnp.zeros((inner_dim,), jnp.float32),
        # Conv1d(inner_dim, out_dim, k=1)
        "w2": jax.random.uniform(k3, (out_dim, inner_dim), jnp.float32, -s2, s2),
        "b2": jax.random.uniform(k4, (out_dim,), jnp.float32, -s2, s2),
    }


def _reference(x, params, eps=1e-5):
    """Pure-JAX f32 reference of the PyTorch forward (training-mode BN)."""
    B, L, C = x.shape
    xf = x.reshape(B * L, C)
    h = xf @ params["w1"].T + params["b1"]
    mean = jnp.mean(h, axis=0)
    var = jnp.mean((h - mean) ** 2, axis=0)
    h = (h - mean) / jnp.sqrt(var + eps) * params["gamma"] + params["beta"]
    h = jnp.maximum(h, 0.0)
    y = h @ params["w2"].T + params["b2"]
    return y.reshape(B, L, -1)


if __name__ == "__main__":
    key = jax.random.PRNGKey(0)
    k_x, k_p, k_x2 = jax.random.split(key, 3)

    B, L = 2, 16
    in_dim, inner_dim, out_dim = 32, 128, 32

    x = jax.random.normal(k_x, (B, L, in_dim), jnp.float32)
    params = make_params(k_p, in_dim, inner_dim, out_dim)
    y_ref = _reference(x, params)

    # 1) exact path (f32 MXU operands), single large tile.
    y32 = jax.block_until_ready(
        project_mlp_forward(x, params, mxu_dtype=jnp.float32))
    assert y32.shape == (B, L, out_dim), y32.shape
    assert jnp.allclose(y32, y_ref, rtol=1e-4, atol=1e-4), (
        float(jnp.max(jnp.abs(y32 - y_ref))))

    # 2) multi-tile path (exercises parallel partial-sum stats accumulation).
    y_mt = jax.block_until_ready(
        project_mlp_forward(x, params, tn=8, mxu_dtype=jnp.float32))
    assert jnp.allclose(y_mt, y_ref, rtol=1e-4, atol=1e-4), (
        float(jnp.max(jnp.abs(y_mt - y_ref))))

    # 3) ragged-row path (N not a multiple of 8 -> padding + masked stats).
    x3 = jax.random.normal(k_x2, (3, 5, in_dim), jnp.float32)
    y3 = jax.block_until_ready(
        project_mlp_forward(x3, params, mxu_dtype=jnp.float32))
    assert jnp.allclose(y3, _reference(x3, params), rtol=1e-4, atol=1e-4), (
        float(jnp.max(jnp.abs(y3 - _reference(x3, params)))))

    # 4) default fast path: bf16 MXU operands, f32 accumulation / elementwise.
    y_bf = jax.block_until_ready(project_mlp_forward(x, params))
    assert y_bf.shape == (B, L, out_dim), y_bf.shape
    assert jnp.allclose(y_bf, y_ref, rtol=3e-2, atol=3e-2), (
        float(jnp.max(jnp.abs(y_bf - y_ref))))

    print("KERNEL_OK")
</pallas_src>

<mosaic_0001>
module attributes {stable_mosaic.version = 11 : i64} {
  func.func @_stats_kernel(%arg0: i32, %arg1: i32, %arg2: memref<32x32xf32, #tpu.memory_space<vmem>>, %arg3: memref<32x128xf32, #tpu.memory_space<vmem>>, %arg4: memref<1x128xf32, #tpu.memory_space<vmem>>, %arg5: memref<8x128xf32, #tpu.memory_space<vmem>>, %arg6: memref<8x128xf32, #tpu.memory_space<vmem>>) attributes {dimension_semantics = [#tpu.dimension_semantics<parallel>, #tpu.dimension_semantics<arbitrary>], iteration_bounds = array<i64: 1, 1>, scalar_prefetch = 0 : i64, scratch_operands = 0 : i64, tpu.core_type = #tpu.core_type<tc>, window_params = [{transform_indices = @transform_0, window_bounds = array<i64: 32, 32>}, {pipeline_mode = #tpu.pipeline_mode<synchronous>, transform_indices = @transform_1, window_bounds = array<i64: 32, 128>}, {pipeline_mode = #tpu.pipeline_mode<synchronous>, transform_indices = @transform_2, window_bounds = array<i64: 1, 128>}, {transform_indices = @transform_3, window_bounds = array<i64: 8, 128>}, {transform_indices = @transform_4, window_bounds = array<i64: 8, 128>}]} {
    %c0_i32 = arith.constant 0 : i32
    %0 = arith.cmpi eq, %arg1, %c0_i32 : i32
    %1 = arith.extui %0 : i1 to i32
    %c0_i32_0 = arith.constant 0 : i32
    %2 = arith.cmpi ne, %1, %c0_i32_0 : i32
    scf.if %2 {
      %cst_16 = arith.constant 0.000000e+00 : f32
      %20 = vector.broadcast %cst_16 : f32 to vector<8x128xf32>
      %c0_17 = arith.constant 0 : index
      %c0_18 = arith.constant 0 : index
      %21 = vector.load %arg5[%c0_17, %c0_18] : memref<8x128xf32, #tpu.memory_space<vmem>>, vector<8x128xf32>
      tpu.vector_store %arg5[%c0_17, %c0_18], %20 {strides = array<i32>} : memref<8x128xf32, #tpu.memory_space<vmem>>, vector<8x128xf32>,
      %cst_19 = arith.constant 0.000000e+00 : f32
      %22 = vector.broadcast %cst_19 : f32 to vector<8x128xf32>
      %c0_20 = arith.constant 0 : index
      %c0_21 = arith.constant 0 : index
      %23 = vector.load %arg6[%c0_20, %c0_21] : memref<8x128xf32, #tpu.memory_space<vmem>>, vector<8x128xf32>
      tpu.vector_store %arg6[%c0_20, %c0_21], %22 {strides = array<i32>} : memref<8x128xf32, #tpu.memory_space<vmem>>, vector<8x128xf32>,
    } else {
    }
    %c0 = arith.constant 0 : index
    %c0_1 = arith.constant 0 : index
    %3 = vector.load %arg2[%c0, %c0_1] : memref<32x32xf32, #tpu.memory_space<vmem>>, vector<32x32xf32>
    %c0_2 = arith.constant 0 : index
    %c0_3 = arith.constant 0 : index
    %4 = vector.load %arg3[%c0_2, %c0_3] : memref<32x128xf32, #tpu.memory_space<vmem>>, vector<32x128xf32>
    %cst = arith.constant dense<0.000000e+00> : vector<32x128xf32>
    %5 = tpu.matmul %3, %4, %cst {dimension_numbers = #tpu.dot_dimension_numbers<[1], [0], [0], [1], [0, 0, 1, 1], [], []>} : vector<32x32xf32>, vector<32x128xf32>, vector<32x128xf32> -> vector<32x128xf32>
    %c0_4 = arith.constant 0 : index
    %c0_5 = arith.constant 0 : index
    %6 = vector.load %arg4[%c0_4, %c0_5] : memref<1x128xf32, #tpu.memory_space<vmem>>, vector<1x128xf32>
    %7 = vector.broadcast %6 : vector<1x128xf32> to vector<32x128xf32>
    %8 = arith.addf %5, %7 : vector<32x128xf32>
    %c0_6 = arith.constant 0 : index
    %c0_7 = arith.constant 0 : index
    %9 = vector.load %arg5[%c0_6, %c0_7] : memref<8x128xf32, #tpu.memory_space<vmem>>, vector<1x128xf32>
    %cst_8 = arith.constant dense<0.000000e+00> : vector<128xf32>
    %10 = vector.multi_reduction <add>, %8, %cst_8 [0] : vector<32x128xf32> to vector<128xf32>
    %11 = vector.shape_cast %10 : vector<128xf32> to vector<1x128xf32>
    %12 = arith.addf %9, %11 : vector<1x128xf32>
    %c0_9 = arith.constant 0 : index
    %c0_10 = arith.constant 0 : index
    %13 = vector.load %arg5[%c0_9, %c0_10] : memref<8x128xf32, #tpu.memory_space<vmem>>, vector<1x128xf32>
    tpu.vector_store %arg5[%c0_9, %c0_10], %12 {strides = array<i32>} : memref<8x128xf32, #tpu.memory_space<vmem>>, vector<1x128xf32>,
    %c0_11 = arith.constant 0 : index
    %c0_12 = arith.constant 0 : index
    %14 = vector.load %arg6[%c0_11, %c0_12] : memref<8x128xf32, #tpu.memory_space<vmem>>, vector<1x128xf32>
    %15 = arith.mulf %8, %8 : vector<32x128xf32>
    %cst_13 = arith.constant dense<0.000000e+00> : vector<128xf32>
    %16 = vector.multi_reduction <add>, %15, %cst_13 [0] : vector<32x128xf32> to vector<128xf32>
    %17 = vector.shape_cast %16 : vector<128xf32> to vector<1x128xf32>
    %18 = arith.addf %14, %17 : vector<1x128xf32>
    %c0_14 = arith.constant 0 : index
    %c0_15 = arith.constant 0 : index
    %19 = vector.load %arg6[%c0_14, %c0_15] : memref<8x128xf32, #tpu.memory_space<vmem>>, vector<1x128xf32>
    tpu.vector_store %arg6[%c0_14, %c0_15], %18 {strides = array<i32>} : memref<8x128xf32, #tpu.memory_space<vmem>>, vector<1x128xf32>,
    return
  }
  func.func @transform_0(%arg0: i32, %arg1: i32) -> (i32, i32) {
    %c1_i32 = arith.constant 1 : i32
    %0 = arith.muli %arg0, %c1_i32 : i32
    %1 = arith.addi %0, %arg1 : i32
    %c0_i32 = arith.constant 0 : i32
    %c0_i32_0 = arith.constant 0 : i32
    return %1, %c0_i32 : i32, i32
  }
  func.func @transform_1(%arg0: i32, %arg1: i32) -> (i32, i32) {
    %c0_i32 = arith.constant 0 : i32
    %c0_i32_0 = arith.constant 0 : i32
    %c0_i32_1 = arith.constant 0 : i32
    return %c0_i32, %c0_i32_0 : i32, i32
  }
  func.func @transform_2(%arg0: i32, %arg1: i32) -> (i32, i32) {
    %c0_i32 = arith.constant 0 : i32
    %c0_i32_0 = arith.constant 0 : i32
    %c0_i32_1 = arith.constant 0 : i32
    return %c0_i32, %c0_i32_0 : i32, i32
  }
  func.func @transform_3(%arg0: i32, %arg1: i32) -> (i32, i32) {
    %c0_i32 = arith.constant 0 : i32
    %c0_i32_0 = arith.constant 0 : i32
    return %arg0, %c0_i32 : i32, i32
  }
  func.func @transform_4(%arg0: i32, %arg1: i32) -> (i32, i32) {
    %c0_i32 = arith.constant 0 : i32
    %c0_i32_0 = arith.constant 0 : i32
    return %arg0, %c0_i32 : i32, i32
  }
}

</mosaic_0001>

<llo_original>
// kernel: tpu_custom_call.1
$region0: #{tpu_custom_call.1}
  #allocation0 [shape = 'u32[]', space=smem, size = 0x4, offset = 0x4, fixed_abs, tag = 'smem constant byte address 0x4 - core index']
  #allocation1 [shape = 'u32[144,128]{1,0:T(1,128)}', space=vmem, size = 0x12000, scoped, tag = 'internal scratch']
  %s0 = inlined_call_operand.hbm [shape: f32[32,32], index: 0, kind: input, shape index: {}]
  %s1 = inlined_call_operand.hbm [shape: f32[32,128], index: 1, kind: input, shape index: {}]
  %s2 = inlined_call_operand.vmem [shape: f32[1,128], index: 2, kind: input, shape index: {}]
  %s3 = inlined_call_operand.hbm [shape: f32[8,128], index: 3, kind: output, shape index: {0}]
  %s4 = inlined_call_operand.hbm [shape: f32[8,128], index: 4, kind: output, shape index: {1}]
  %5 = xla_tuple %s3, %s4
  %s6 = sld [smem:[#allocation0]]
  $region42: #{tpu_custom_call.1} parent=0
    _
  %s8 = ssub.s32 1, %s6
  %s9 = scalar_select 0, %s8, %s6
  $region1: #{tpu_custom_call.1} parent=0
    #allocation2 [shape = 'u8[16384]{0}', space=vmem, size = 0x4000, scoped, tag = 'input window, operand 0, single buffered']
    #allocation3 [shape = 's32[1]{0}', space=sflag, size = 0x4, scoped, tag = 'scoped memory for tpu_custom_call.1']
    #allocation4 [shape = 's32[1]{0}', space=sflag, size = 0x4, scoped, tag = 'scoped memory for tpu_custom_call.1']
    #allocation5 [shape = 'u8[16384]{0}', space=vmem, size = 0x4000, scoped, tag = 'input window, operand 1, single buffered']
    #allocation6 [shape = 's32[1]{0}', space=sflag, size = 0x4, scoped, tag = 'scoped memory for tpu_custom_call.1']
    #allocation7 [shape = 'u8[4096]{0}', space=vmem, size = 0x1000, scoped, tag = 'output window, operand 0, single buffered']
    #allocation8 [shape = 'u8[4096]{0}', space=vmem, size = 0x1000, scoped, tag = 'output window, operand 1, single buffered']
    #allocation9 [shape = 's32[1]{0}', space=sflag, size = 0x4, scoped, tag = 'scoped memory for tpu_custom_call.1']
    %10 = vsyncpa [#allocation3], 0
    %11 = vsyncpa [#allocation6], 0
    %12 = vsyncpa [#allocation4], 0
    %13 = vsyncpa [#allocation9], 0
    // Predicated region
    $region2: #{tpu_custom_call.1} parent=1 // pred_check
      _
    $region3: #{tpu_custom_call.1} parent=1 // pred_check_branch
      %15 = sbr.rel (0) target = $region5
    $region4: #{tpu_custom_call.1} parent=1 // pred_region
      %s16 = sadd.s32 0, 0
      %s17 = smul.u32 4, %s16
      %s19 = ssub.s32 512, 512
      %20 = vsyncadd [#allocation3], %s19
      %s21 = smul.addr %s17, 128
      %s22 = scalar_lea.hbm %s0, %s21
      %s23 = sshll.u32 [#allocation2], 4
      %s24 = int_to_ptr.vmem [resolvable:$true] %s23
      %29 = dma.hbm_to_vmem [thread:$0]  %s22, 512, %s24, [#allocation3], 128, 128, 8
    $region5: #{tpu_custom_call.1} parent=1 // pred_fallthru
      _
    // Predicated region
    $region6: #{tpu_custom_call.1} parent=1 // pred_check
      _
    $region7: #{tpu_custom_call.1} parent=1 // pred_check_branch
      %31 = sbr.rel (0) target = $region9
    $region8: #{tpu_custom_call.1} parent=1 // pred_region
      %s33 = ssub.s32 512, 512
      %34 = vsyncadd [#allocation6], %s33
      %s35 = sshll.u32 [#allocation5], 4
      %s36 = int_to_ptr.vmem [resolvable:$true] %s35
      %41 = dma.hbm_to_vmem [thread:$0]  %s1, 512, %s36, [#allocation6], 128, 128, 8
    $region9: #{tpu_custom_call.1} parent=1 // pred_fallthru
      _
    // Predicated region
    $region10: #{tpu_custom_call.1} parent=1 // pred_check
      _
    $region11: #{tpu_custom_call.1} parent=1 // pred_check_branch
      %43 = sbr.rel (0) target = $region13
    $region12: #{tpu_custom_call.1} parent=1 // pred_region
      _
    $region13: #{tpu_custom_call.1} parent=1 // pred_fallthru
      _
    // Predicated region
    $region14: #{tpu_custom_call.1} parent=1 // pred_check
      _
    $region15: #{tpu_custom_call.1} parent=1 // pred_check_branch
      %45 = sbr.rel (0) target = $region17
    $region16: #{tpu_custom_call.1} parent=1 // pred_region
      %46 = dma.done [#allocation3], 512
    $region17: #{tpu_custom_call.1} parent=1 // pred_fallthru
      _
    // Predicated region
    $region18: #{tpu_custom_call.1} parent=1 // pred_check
      _
    $region19: #{tpu_custom_call.1} parent=1 // pred_check_branch
      %48 = sbr.rel (0) target = $region21
    $region20: #{tpu_custom_call.1} parent=1 // pred_region
      %49 = dma.done [#allocation6], 512
    $region21: #{tpu_custom_call.1} parent=1 // pred_fallthru
      _
    %s50 = sadd.s32 0, 0
    %s51 = smul.u32 4, %s50
    %p52 = scmp.eq.s32.totalorder 0, 0
    // Predicated region
    $region22: #{tpu_custom_call.1} parent=1 // pred_check
      %p53 = pneg %p52
    $region23: #{tpu_custom_call.1} parent=1 // pred_check_branch
      %55 = sbr.rel (%p53) target = $region25
    $region24: #{tpu_custom_call.1} parent=1 // pred_region
      %56 = vst [vmem:[#allocation7] sm:$0xff] 0.0
      %57 = vst [vmem:[#allocation8] sm:$0xff] 0.0
    $region25: #{tpu_custom_call.1} parent=1 // pred_fallthru
      _
    %v58 = vld [vmem:[#allocation2] sm:$0xff]
    %v59 = vld [vmem:[#allocation2 + $0x8] sm:$0xff]
    %v60 = vld [vmem:[#allocation2 + $0x10] sm:$0xff]
    %v61 = vld [vmem:[#allocation2 + $0x18] sm:$0xff]
    %v62 = vld [vmem:[#allocation5] sm:$0xff]
    %v63 = vld [vmem:[#allocation5 + $0x8] sm:$0xff]
    %v64 = vld [vmem:[#allocation5 + $0x10] sm:$0xff]
    %v65 = vld [vmem:[#allocation5 + $0x18] sm:$0xff]
    %v66 = vld [vmem:[%s2] sm:$0x1]
    %v68 = vlaneseq
    %v69 = vshrl.u32 %v68, 7
    %v70 = vsub.s32 0, %v69
    %v71 = vrot.slane %v66, %v70
    %vm73 = vcmask 261120
    %v75 = vsel %vm73, %v58, 0
    %v78 = vsel %vm73, %v59, 0
    %v81 = vsel %vm73, %v60, 0
    %v84 = vsel %vm73, %v61, 0
    %86 = vmatprep.subr.mxu0 0.0
    %87 = vmatpush1.msra.mxu0 %v62
    %88 = vmatprep.subr.mxu0 0.0
    %89 = vmatpush1.msra.mxu0 %v63
    %90 = vmatprep.subr.mxu0 0.0
    %91 = vmatpush1.msra.mxu0 %v64
    %92 = vmatprep.subr.mxu0 0.0
    %93 = vmatpush1.msra.mxu0 %v65
    %94 = vmatprep.subr.mxu0 0.0
    %95 = vmatpush1.msra.mxu0 0.0
    %96 = vmatprep.subr.mxu0 0.0
    %97 = vmatpush1.msra.mxu0 0.0
    %98 = vmatprep.subr.mxu0 0.0
    %99 = vmatpush1.msra.mxu0 0.0
    %100 = vmatprep.subr.mxu0 0.0
    %101 = vmatpush1.msra.mxu0 0.0
    %102 = vmatprep.subr.mxu0 0.0
    %103 = vmatpush1.msra.mxu0 0.0
    %104 = vmatprep.subr.mxu0 0.0
    %105 = vmatpush1.msra.mxu0 0.0
    %106 = vmatprep.subr.mxu0 0.0
    %107 = vmatpush1.msra.mxu0 0.0
    %108 = vmatprep.subr.mxu0 0.0
    %109 = vmatpush1.msra.mxu0 0.0
    %110 = vmatprep.subr.mxu0 0.0
    %111 = vmatpush1.msra.mxu0 0.0
    %112 = vmatprep.subr.mxu0 0.0
    %113 = vmatpush1.msra.mxu0 0.0
    %114 = vmatprep.subr.mxu0 0.0
    %115 = vmatpush1.msra.mxu0 0.0
    %116 = vmatprep.subr.mxu0 0.0
    %117 = vmatpush1.msra.mxu0 0.0
    %118 = vmatprep.subr.mxu0 0.0
    %119 = vmatpush1.msra.mxu0 0.0
    %120 = vmatprep.subr.mxu0 0.0
    %121 = vmatpush1.msra.mxu0 0.0
    %122 = vmatprep.subr.mxu0 0.0
    %123 = vmatpush1.msra.mxu0 0.0
    %124 = vmatprep.subr.mxu0 0.0
    %125 = vmatpush1.msra.mxu0 0.0
    %126 = vmatprep.subr.mxu0 0.0
    %127 = vmatpush1.msra.mxu0 0.0
    %128 = vmatprep.subr.mxu0 0.0
    %129 = vmatpush1.msra.mxu0 0.0
    %130 = vmatprep.subr.mxu0 0.0
    %131 = vmatpush1.msra.mxu0 0.0
    %132 = vmatprep.subr.mxu0 0.0
    %133 = vmatpush1.msra.mxu0 0.0
    %134 = vmatprep.subr.mxu0 0.0
    %135 = vmatpush1.msra.mxu0 0.0
    %136 = vmatprep.subr.mxu0 0.0
    %137 = vmatpush1.msra.mxu0 0.0
    %138 = vmatprep.subr.mxu0 0.0
    %139 = vmatpush1.msra.mxu0 0.0
    %140 = vmatprep.subr.mxu0 0.0
    %141 = vmatpush1.msra.mxu0 0.0
    %142 = vmatprep.subr.mxu0 0.0
    %143 = vmatpush1.msra.mxu0 0.0
    %144 = vmatprep.subr.mxu0 0.0
    %145 = vmatpush1.msra.mxu0 0.0
    %146 = vmatprep.subr.mxu0 0.0
    %147 = vmatpush1.msra.mxu0 0.0
    %148 = vmatprep.subr.mxu0 0.0
    %149 = vmatpush1.msra.mxu0 0.0
    %150 = vmatprep.mubr.f32.mxu0 0.0
    %151 = vmatmul.mubr.f32.gmra.mrb[0].mxu0 %v75
    %v152 = vpop.f32.mrb[0].mxu0
    %v153 = vadd.f32 %v71, %v152
    %v154 = vpop.f32.mrb[0].mxu0
    %155 = vmatprep.mubr.f32.mxu0 0.0
    %156 = vmatmul.mubr.f32.gmra.mrb[0].mxu0 %v78
    %v157 = vpop.f32.mrb[0].mxu0
    %v158 = vadd.f32 %v71, %v157
    %v159 = vpop.f32.mrb[0].mxu0
    %160 = vmatprep.mubr.f32.mxu0 0.0
    %161 = vmatmul.mubr.f32.gmra.mrb[0].mxu0 %v81
    %v162 = vpop.f32.mrb[0].mxu0
    %v163 = vadd.f32 %v71, %v162
    %v164 = vpop.f32.mrb[0].mxu0
    %165 = vmatprep.mubr.f32.mxu0 0.0
    %166 = vmatmul.mubr.f32.gmra.mrb[0].mxu0 %v84
    %v167 = vpop.f32.mrb[0].mxu0
    %v168 = vadd.f32 %v71, %v167
    %v169 = vpop.f32.mrb[0].mxu0
    %170 = vdwg.mxu0
    %v171 = vld [vmem:[#allocation7] sm:$0x1]
    %v172 = vadd.f32 %v153, %v158
    %v173 = vadd.f32 %v172, %v163
    %v174 = vadd.f32 %v173, %v168
    %v175 = vrot.slane %v174, 4
    %v176 = vadd.f32 %v174, %v175
    %v177 = vrot.slane %v176, 2
    %v178 = vadd.f32 %v176, %v177
    %v179 = vrot.slane %v178, 1
    %v180 = vadd.f32 %v178, %v179
    %v181 = vadd.f32 %v171, %v180
    %182 = vst [vmem:[#allocation7] sm:$0x1] %v181
    %v183 = vld [vmem:[#allocation8] sm:$0x1]
    %v184 = vmul.f32 %v153, %v153
    %v185 = vmul.f32 %v158, %v158
    %v186 = vmul.f32 %v163, %v163
    %v187 = vmul.f32 %v168, %v168
    %v188 = vadd.f32 %v184, %v185
    %v189 = vadd.f32 %v188, %v186
    %v190 = vadd.f32 %v189, %v187
    %v191 = vrot.slane %v190, 4
    %v192 = vadd.f32 %v190, %v191
    %v193 = vrot.slane %v192, 2
    %v194 = vadd.f32 %v192, %v193
    %v195 = vrot.slane %v194, 1
    %v196 = vadd.f32 %v194, %v195
    %v197 = vadd.f32 %v183, %v196
    %198 = vst [vmem:[#allocation8] sm:$0x1] %v197
    // Predicated region
    $region26: #{tpu_custom_call.1} parent=1 // pred_check
      _
    $region27: #{tpu_custom_call.1} parent=1 // pred_check_branch
      %200 = sbr.rel (0) target = $region29
    $region28: #{tpu_custom_call.1} parent=1 // pred_region
      %s202 = ssub.s32 128, 128
      %203 = vsyncadd [#allocation4], %s202
      %s205 = sshll.u32 [#allocation7], 4
      %s206 = int_to_ptr.vmem [resolvable:$true] %s205
      %208 = dma.vmem_to_hbm [thread:$0]  %s206, 128, %s3, [#allocation4]
    $region29: #{tpu_custom_call.1} parent=1 // pred_fallthru
      _
    // Predicated region
    $region30: #{tpu_custom_call.1} parent=1 // pred_check
      _
    $region31: #{tpu_custom_call.1} parent=1 // pred_check_branch
      %210 = sbr.rel (0) target = $region33
    $region32: #{tpu_custom_call.1} parent=1 // pred_region
      %s212 = ssub.s32 128, 128
      %213 = vsyncadd [#allocation9], %s212
      %s215 = sshll.u32 [#allocation8], 4
      %s216 = int_to_ptr.vmem [resolvable:$true] %s215
      %218 = dma.vmem_to_hbm [thread:$0]  %s216, 128, %s4, [#allocation9]
    $region33: #{tpu_custom_call.1} parent=1 // pred_fallthru
      _
    // Predicated region
    $region34: #{tpu_custom_call.1} parent=1 // pred_check
      _
    $region35: #{tpu_custom_call.1} parent=1 // pred_check_branch
      %220 = sbr.rel (0) target = $region37
    $region36: #{tpu_custom_call.1} parent=1 // pred_region
      %221 = dma.done [#allocation4], 128
    $region37: #{tpu_custom_call.1} parent=1 // pred_fallthru
      _
    // Predicated region
    $region38: #{tpu_custom_call.1} parent=1 // pred_check
      _
    $region39: #{tpu_custom_call.1} parent=1 // pred_check_branch
      %223 = sbr.rel (0) target = $region41
    $region40: #{tpu_custom_call.1} parent=1 // pred_region
      %224 = dma.done [#allocation9], 128
    $region41: #{tpu_custom_call.1} parent=1 // pred_fallthru
      _
    %225 = vsyncpa [#allocation3], 1
    %226 = vsyncpa [#allocation6], 1
    %227 = vsyncpa [#allocation4], 1
    %228 = vsyncpa [#allocation9], 1

</llo_original>
